<compile_context>
chip_gen: v7x
topology: tpu7x:2x2x1
jax: 0.10.0
libtpu: 0.0.40
codegen_flags: <defaults>
</compile_context>

<pallas_src>
import jax
import jax.numpy as jnp
from jax.experimental import pallas as pl
from jax.experimental.pallas import tpu as pltpu


def _round_up(x, m):
    return ((x + m - 1) // m) * m


# ----------------------------------------------------------------------------
# Kernel 1: per-channel sum / sum-of-squares partials for training-mode BN.
# Grid = (N, P-tiles), both axes parallel; partials combined in JAX.
# ----------------------------------------------------------------------------
def bn_stats_kernel(x_ref, sum_ref, sq_ref):
    cin = x_ref.shape[-1]
    s = jnp.zeros((1, cin), jnp.float32)
    sq = jnp.zeros((1, cin), jnp.float32)
    for q in range(4):                                 # slab-wise: one (Pt, Cin) f32 temp at a time
        xq = x_ref[0, q].astype(jnp.float32)           # (Pt, Cin)
        s = s + xq.sum(axis=0, keepdims=True)
        sq = sq + (xq * xq).sum(axis=0, keepdims=True)
    sum_ref[...] = s[None, None]                       # (1, 1, 1, Cin)
    sq_ref[...] = sq[None, None]


# ----------------------------------------------------------------------------
# Kernel 2: BN affine + ReLU + 2x2 pool-sum (slab-wise) + single 1x1-conv matmul.
# (0.25 avg factor is pre-folded into the weight.)
# ----------------------------------------------------------------------------
def transition_kernel(x_ref, scale_ref, shift_ref, w_ref, o_ref):
    scale = scale_ref[...]                             # (1, Cin) f32
    shift = shift_ref[...]
    # Slab-wise accumulation keeps ~2x(Pt,Cin) of f32 live instead of ~5x.
    pooled = jnp.maximum(x_ref[0, 0].astype(jnp.float32) * scale + shift, 0.0)
    for q in range(1, 4):
        pooled = pooled + jnp.maximum(x_ref[0, q].astype(jnp.float32) * scale + shift, 0.0)
    w = w_ref[...]                                     # (Cin, Cout_pad); 0.25 pool factor folded in
    acc = jnp.dot(pooled.astype(w.dtype), w, preferred_element_type=jnp.float32)
    o_ref[0] = acc.astype(o_ref.dtype)                 # lane-dense (Pt, Cout_pad) store


# ----------------------------------------------------------------------------
# Per-generation VMEM plan: explicit scoped limit + tile-sizing budget.
#   v7x  (64 MiB/TC)  -> limit ~51 MiB, budget ~38 MiB   (within the <=48 MiB guidance)
#   v5e/v6e (128 MiB) -> limit 100 MiB, budget  75 MiB   (well above the 16/32 MiB defaults)
# ----------------------------------------------------------------------------
def _vmem_plan():
    try:
        cap = int(pltpu.get_tpu_info().vmem_capacity_bytes)
    except Exception:
        cap = 64 << 20                                 # conservative: v7x per-core VMEM
    limit = min(int(cap * 0.8), 100 << 20)
    budget = int(limit * 0.75)                         # headroom for compiler temporaries
    return limit, budget


# ----------------------------------------------------------------------------
# Tile chooser: largest MXU-friendly Pt whose *full* pass-2 live set fits the budget.
#   live set ~= 2x input block + 2x output block + weight + f32 slab/pool/acc temporaries
# Prefers multiples of 256/128 that divide P exactly; otherwise pads P (zeros keep BN sums exact).
# ----------------------------------------------------------------------------
def _choose_p_tile(P, Cin, Cout_pad, itemsize, budget_bytes):
    sub = max(8, 32 // itemsize)                       # sublane packing: 8 f32, 16 bf16, 32 int8/fp8
    fixed = 2 * Cin * Cout_pad * itemsize + 4 * 2 * Cin * 4          # weight + scale/shift blocks
    per_row = (2 * 4 * Cin * itemsize                  # input block (double-buffered)
               + 2 * Cout_pad * itemsize               # output block (double-buffered)
               + 2 * Cin * 4                           # f32 slab + pooled accumulator
               + Cout_pad * 4)                         # f32 matmul accumulator
    max_rows = max(sub, (budget_bytes - fixed) // per_row)
    max_rows = max(sub, (max_rows // sub) * sub)
    if P <= max_rows:
        return _round_up(P, sub)                       # single tile covering all of P
    for align in (256, 128):                           # MXU-aligned exact divisors, largest first
        top = (min(max_rows, P) // align) * align
        for pt in range(top, align - 1, -align):
            if P % pt == 0:
                return pt
    top = (min(max_rows, P) // sub) * sub              # smaller exact divisors (but not tiny tiles)
    for pt in range(top, 8 * sub - 1, -sub):
        if P % pt == 0:
            return pt
    if max_rows >= 256:                                # fall back to aligned tile + padded P
        return (max_rows // 256) * 256
    if max_rows >= 128:
        return 128
    return max_rows


# ----------------------------------------------------------------------------
# Wrapper (layout plumbing + parameter folding stays in plain JAX)
# ----------------------------------------------------------------------------
def transition_forward(x_nchw, gamma, beta, conv_w, eps=1e-5, *,
                       matmul_dtype=None, channels_last_out=False):
    N, Cin, H, W = x_nchw.shape
    Cout = conv_w.shape[0]
    # TODO(synk): odd H/W would need PyTorch AvgPool2d truncation semantics; assume even.
    assert H % 2 == 0 and W % 2 == 0, "Transition avg-pool path assumes even H, W"
    Hp, Wp = H // 2, W // 2
    P = Hp * Wp

    cdt = x_nchw.dtype                                 # keep activation storage dtype
    itemsize = jnp.dtype(cdt).itemsize
    # matmul operand dtype knob: pass jnp.bfloat16 on v5e to avoid multi-pass f32 MXU matmuls
    # (kept at the activation dtype by default to preserve f32 parity with the reference).
    mm_dtype = jnp.dtype(matmul_dtype) if matmul_dtype is not None else jnp.dtype(cdt)

    Cout_pad = _round_up(Cout, 128)                    # lane-dense output stores
    vmem_limit, vmem_budget = _vmem_plan()
    Pt = _choose_p_tile(P, Cin, Cout_pad,
                        max(itemsize, jnp.dtype(mm_dtype).itemsize), vmem_budget)
    nt = pl.cdiv(P, Pt)
    P_pad = nt * Pt

    # Single layout pass (XLA): NCHW -> (N, 4, P, Cin); pool position q = 2*i + j outermost after
    # batch so each pool slab is a contiguous channels-last (P, Cin) tile (lane = channels).
    x_pool = (x_nchw.reshape(N, Cin, Hp, 2, Wp, 2)
                     .transpose(0, 3, 5, 2, 4, 1)
                     .reshape(N, 4, P, Cin))
    if P_pad != P:
        # zero padding keeps BN sums exact (count below uses the real N*H*W)
        x_pool = jnp.pad(x_pool, ((0, 0), (0, 0), (0, P_pad - P), (0, 0)))

    # --- pass 1: BN batch statistics (per-(batch, tile) partials, fully parallel grid) ---
    s_part, sq_part = pl.pallas_call(
        bn_stats_kernel,
        out_shape=(jax.ShapeDtypeStruct((N, nt, 1, Cin), jnp.float32),
                   jax.ShapeDtypeStruct((N, nt, 1, Cin), jnp.float32)),
        grid=(N, nt),
        in_specs=[pl.BlockSpec((1, 4, Pt, Cin), lambda n, t: (n, 0, t, 0))],
        out_specs=(pl.BlockSpec((1, 1, 1, Cin), lambda n, t: (n, t, 0, 0)),
                   pl.BlockSpec((1, 1, 1, Cin), lambda n, t: (n, t, 0, 0))),
        compiler_params=pltpu.CompilerParams(
            dimension_semantics=("parallel", "parallel"),
            vmem_limit_bytes=vmem_limit),
    )(x_pool)

    cnt = float(N * H * W)
    s = jnp.sum(s_part, axis=(0, 1, 2))                # (Cin,)
    sq = jnp.sum(sq_part, axis=(0, 1, 2))
    mean = s / cnt
    # TODO(synk): E[x^2]-mean^2 can cancel for large-mean/low-variance channels; a Welford-style
    #             per-tile (count, mean, M2) combine would be more robust.
    var = jnp.maximum(sq / cnt - mean * mean, 0.0)     # biased variance (training-mode BN)
    scale = gamma.astype(jnp.float32) / jnp.sqrt(var + eps)
    shift = beta.astype(jnp.float32) - mean * scale

    # --- 1x1 conv weight: (Cin, Cout_pad), 0.25 avg-pool factor folded in, lane-dense Cout ---
    w_mat = jnp.transpose(conv_w.reshape(Cout, Cin), (1, 0)) * 0.25
    if Cout_pad != Cout:
        w_mat = jnp.pad(w_mat, ((0, 0), (0, Cout_pad - Cout)))
    w_mat = w_mat.astype(mm_dtype)

    # --- pass 2: BN + ReLU + pool-sum (slab-wise) + single matmul ---
    # (scale/shift/weight have constant index_maps; single-buffering them via pipeline_mode is a
    #  further small VMEM saving left out for lowering safety.)
    out = pl.pallas_call(
        transition_kernel,
        out_shape=jax.ShapeDtypeStruct((N, P_pad, Cout_pad), cdt),
        grid=(N, nt),
        in_specs=[pl.BlockSpec((1, 4, Pt, Cin), lambda n, t: (n, 0, t, 0)),
                  pl.BlockSpec((1, Cin), lambda n, t: (0, 0)),
                  pl.BlockSpec((1, Cin), lambda n, t: (0, 0)),
                  pl.BlockSpec((Cin, Cout_pad), lambda n, t: (0, 0))],
        out_specs=pl.BlockSpec((1, Pt, Cout_pad), lambda n, t: (n, t, 0)),
        compiler_params=pltpu.CompilerParams(
            dimension_semantics=("parallel", "parallel"),
            vmem_limit_bytes=vmem_limit),
    )(x_pool, scale.reshape(1, Cin), shift.reshape(1, Cin), w_mat)

    out = out[:, :P, :Cout]
    out_nhwc = out.reshape(N, Hp, Wp, Cout)
    if channels_last_out:
        return out_nhwc                                # skip the re-transpose (saves 2x|out| HBM)
    return out_nhwc.transpose(0, 3, 1, 2)              # NCHW module contract


# ----------------------------------------------------------------------------
# Pure-JAX reference (mirrors the PyTorch forward in training mode)
# ----------------------------------------------------------------------------
def ref_forward(x, gamma, beta, conv_w, eps=1e-5):
    mean = x.mean(axis=(0, 2, 3))
    var = x.var(axis=(0, 2, 3))                        # biased, as BN uses for normalization
    xn = (x - mean[None, :, None, None]) / jnp.sqrt(var + eps)[None, :, None, None]
    h = jnp.maximum(xn * gamma[None, :, None, None] + beta[None, :, None, None], 0.0)
    w2 = conv_w.reshape(conv_w.shape[0], conv_w.shape[1])
    y = jnp.einsum('nchw,oc->nohw', h, w2)
    N, Co, H, W = y.shape
    return y.reshape(N, Co, H // 2, 2, W // 2, 2).mean(axis=(3, 5))


if __name__ == "__main__":
    key = jax.random.PRNGKey(0)
    k_x, k_w, k_g, k_b = jax.random.split(key, 4)

    N, Cin, H, W = 2, 4, 16, 16
    Cout = 2

    x = jax.random.normal(k_x, (N, Cin, H, W), dtype=jnp.float32)
    conv_w = jax.random.normal(k_w, (Cout, Cin, 1, 1), dtype=jnp.float32) * 0.1
    gamma = 1.0 + 0.1 * jax.random.normal(k_g, (Cin,), dtype=jnp.float32)
    beta = 0.05 * jax.random.normal(k_b, (Cin,), dtype=jnp.float32)

    out = transition_forward(x, gamma, beta, conv_w)
    out = jax.block_until_ready(out)

    ref = ref_forward(x, gamma, beta, conv_w)
    assert out.shape == (N, Cout, H // 2, W // 2), out.shape
    assert jnp.allclose(out, ref, atol=1e-4, rtol=1e-4), float(jnp.max(jnp.abs(out - ref)))

    print("KERNEL_OK")
</pallas_src>

<mosaic_0001>
module attributes {stable_mosaic.version = 11 : i64} {
  func.func @bn_stats_kernel(%arg0: i32, %arg1: i32, %arg2: memref<1x4x64x4xf32, #tpu.memory_space<vmem>>, %arg3: memref<1x1x1x4xf32, #tpu.memory_space<vmem>>, %arg4: memref<1x1x1x4xf32, #tpu.memory_space<vmem>>) attributes {dimension_semantics = [#tpu.dimension_semantics<parallel>, #tpu.dimension_semantics<parallel>], iteration_bounds = array<i64: 2, 1>, scalar_prefetch = 0 : i64, scratch_operands = 0 : i64, tpu.core_type = #tpu.core_type<tc>, window_params = [{transform_indices = @transform_0, window_bounds = array<i64: 1, 4, 64, 4>}, {transform_indices = @transform_1, window_bounds = array<i64: 1, 1, 1, 4>}, {transform_indices = @transform_2, window_bounds = array<i64: 1, 1, 1, 4>}]} {
    %cst = arith.constant 0.000000e+00 : f32
    %0 = vector.broadcast %cst : f32 to vector<1x4xf32>
    %cst_0 = arith.constant 0.000000e+00 : f32
    %1 = vector.broadcast %cst_0 : f32 to vector<1x4xf32>
    %c0 = arith.constant 0 : index
    %c0_1 = arith.constant 0 : index
    %c0_2 = arith.constant 0 : index
    %c0_3 = arith.constant 0 : index
    %2 = vector.load %arg2[%c0, %c0_1, %c0_2, %c0_3] : memref<1x4x64x4xf32, #tpu.memory_space<vmem>>, vector<1x1x64x4xf32>
    %3 = vector.shape_cast %2 : vector<1x1x64x4xf32> to vector<64x4xf32>
    %cst_4 = arith.constant dense<0.000000e+00> : vector<4xf32>
    %4 = vector.multi_reduction <add>, %3, %cst_4 [0] : vector<64x4xf32> to vector<4xf32>
    %5 = vector.shape_cast %4 : vector<4xf32> to vector<1x4xf32>
    %6 = arith.addf %0, %5 : vector<1x4xf32>
    %7 = arith.mulf %3, %3 : vector<64x4xf32>
    %cst_5 = arith.constant dense<0.000000e+00> : vector<4xf32>
    %8 = vector.multi_reduction <add>, %7, %cst_5 [0] : vector<64x4xf32> to vector<4xf32>
    %9 = vector.shape_cast %8 : vector<4xf32> to vector<1x4xf32>
    %10 = arith.addf %1, %9 : vector<1x4xf32>
    %c0_6 = arith.constant 0 : index
    %c1 = arith.constant 1 : index
    %c0_7 = arith.constant 0 : index
    %c0_8 = arith.constant 0 : index
    %11 = vector.load %arg2[%c0_6, %c1, %c0_7, %c0_8] : memref<1x4x64x4xf32, #tpu.memory_space<vmem>>, vector<1x1x64x4xf32>
    %12 = vector.shape_cast %11 : vector<1x1x64x4xf32> to vector<64x4xf32>
    %cst_9 = arith.constant dense<0.000000e+00> : vector<4xf32>
    %13 = vector.multi_reduction <add>, %12, %cst_9 [0] : vector<64x4xf32> to vector<4xf32>
    %14 = vector.shape_cast %13 : vector<4xf32> to vector<1x4xf32>
    %15 = arith.addf %6, %14 : vector<1x4xf32>
    %16 = arith.mulf %12, %12 : vector<64x4xf32>
    %cst_10 = arith.constant dense<0.000000e+00> : vector<4xf32>
    %17 = vector.multi_reduction <add>, %16, %cst_10 [0] : vector<64x4xf32> to vector<4xf32>
    %18 = vector.shape_cast %17 : vector<4xf32> to vector<1x4xf32>
    %19 = arith.addf %10, %18 : vector<1x4xf32>
    %c0_11 = arith.constant 0 : index
    %c2 = arith.constant 2 : index
    %c0_12 = arith.constant 0 : index
    %c0_13 = arith.constant 0 : index
    %20 = vector.load %arg2[%c0_11, %c2, %c0_12, %c0_13] : memref<1x4x64x4xf32, #tpu.memory_space<vmem>>, vector<1x1x64x4xf32>
    %21 = vector.shape_cast %20 : vector<1x1x64x4xf32> to vector<64x4xf32>
    %cst_14 = arith.constant dense<0.000000e+00> : vector<4xf32>
    %22 = vector.multi_reduction <add>, %21, %cst_14 [0] : vector<64x4xf32> to vector<4xf32>
    %23 = vector.shape_cast %22 : vector<4xf32> to vector<1x4xf32>
    %24 = arith.addf %15, %23 : vector<1x4xf32>
    %25 = arith.mulf %21, %21 : vector<64x4xf32>
    %cst_15 = arith.constant dense<0.000000e+00> : vector<4xf32>
    %26 = vector.multi_reduction <add>, %25, %cst_15 [0] : vector<64x4xf32> to vector<4xf32>
    %27 = vector.shape_cast %26 : vector<4xf32> to vector<1x4xf32>
    %28 = arith.addf %19, %27 : vector<1x4xf32>
    %c0_16 = arith.constant 0 : index
    %c3 = arith.constant 3 : index
    %c0_17 = arith.constant 0 : index
    %c0_18 = arith.constant 0 : index
    %29 = vector.load %arg2[%c0_16, %c3, %c0_17, %c0_18] : memref<1x4x64x4xf32, #tpu.memory_space<vmem>>, vector<1x1x64x4xf32>
    %30 = vector.shape_cast %29 : vector<1x1x64x4xf32> to vector<64x4xf32>
    %cst_19 = arith.constant dense<0.000000e+00> : vector<4xf32>
    %31 = vector.multi_reduction <add>, %30, %cst_19 [0] : vector<64x4xf32> to vector<4xf32>
    %32 = vector.shape_cast %31 : vector<4xf32> to vector<1x4xf32>
    %33 = arith.addf %24, %32 : vector<1x4xf32>
    %34 = arith.mulf %30, %30 : vector<64x4xf32>
    %cst_20 = arith.constant dense<0.000000e+00> : vector<4xf32>
    %35 = vector.multi_reduction <add>, %34, %cst_20 [0] : vector<64x4xf32> to vector<4xf32>
    %36 = vector.shape_cast %35 : vector<4xf32> to vector<1x4xf32>
    %37 = arith.addf %28, %36 : vector<1x4xf32>
    %38 = vector.shape_cast %33 : vector<1x4xf32> to vector<1x1x1x4xf32>
    %c0_21 = arith.constant 0 : index
    %c0_22 = arith.constant 0 : index
    %c0_23 = arith.constant 0 : index
    %c0_24 = arith.constant 0 : index
    %39 = vector.load %arg3[%c0_21, %c0_22, %c0_23, %c0_24] : memref<1x1x1x4xf32, #tpu.memory_space<vmem>>, vector<1x1x1x4xf32>
    tpu.vector_store %arg3[%c0_21, %c0_22, %c0_23, %c0_24], %38 {strides = array<i32>} : memref<1x1x1x4xf32, #tpu.memory_space<vmem>>, vector<1x1x1x4xf32>,
    %40 = vector.shape_cast %37 : vector<1x4xf32> to vector<1x1x1x4xf32>
    %c0_25 = arith.constant 0 : index
    %c0_26 = arith.constant 0 : index
    %c0_27 = arith.constant 0 : index
    %c0_28 = arith.constant 0 : index
    %41 = vector.load %arg4[%c0_25, %c0_26, %c0_27, %c0_28] : memref<1x1x1x4xf32, #tpu.memory_space<vmem>>, vector<1x1x1x4xf32>
    tpu.vector_store %arg4[%c0_25, %c0_26, %c0_27, %c0_28], %40 {strides = array<i32>} : memref<1x1x1x4xf32, #tpu.memory_space<vmem>>, vector<1x1x1x4xf32>,
    return
  }
  func.func @transform_0(%arg0: i32, %arg1: i32) -> (i32, i32, i32, i32) {
    %c0_i32 = arith.constant 0 : i32
    %c0_i32_0 = arith.constant 0 : i32
    %c0_i32_1 = arith.constant 0 : i32
    return %arg0, %c0_i32, %arg1, %c0_i32_0 : i32, i32, i32, i32
  }
  func.func @transform_1(%arg0: i32, %arg1: i32) -> (i32, i32, i32, i32) {
    %c0_i32 = arith.constant 0 : i32
    %c0_i32_0 = arith.constant 0 : i32
    %c0_i32_1 = arith.constant 0 : i32
    return %arg0, %arg1, %c0_i32, %c0_i32_0 : i32, i32, i32, i32
  }
  func.func @transform_2(%arg0: i32, %arg1: i32) -> (i32, i32, i32, i32) {
    %c0_i32 = arith.constant 0 : i32
    %c0_i32_0 = arith.constant 0 : i32
    %c0_i32_1 = arith.constant 0 : i32
    return %arg0, %arg1, %c0_i32, %c0_i32_0 : i32, i32, i32, i32
  }
}

</mosaic_0001>

<llo_original>
// kernel: tpu_custom_call.1
$region0: #{tpu_custom_call.1}
  #allocation0 [shape = 'u32[]', space=smem, size = 0x4, offset = 0x4, fixed_abs, tag = 'smem constant byte address 0x4 - core index']
  #allocation1 [shape = 'u32[144,128]{1,0:T(1,128)}', space=vmem, size = 0x12000, scoped, tag = 'internal scratch']
  %s0 = inlined_call_operand.vmem [shape: f32[2,4,64,4], index: 0, kind: input, shape index: {}]
  %s1 = inlined_call_operand.hbm [shape: f32[2,1,1,4], index: 1, kind: output, shape index: {0}]
  %s2 = inlined_call_operand.hbm [shape: f32[2,1,1,4], index: 2, kind: output, shape index: {1}]
  %3 = xla_tuple %s1, %s2
  %s4 = sld [smem:[#allocation0]]
  $region45: #{tpu_custom_call.1} parent=0
    _
  %s6 = ssub.s32 1, %s4
  %s7 = scalar_select 0, %s6, %s4
  $region1: #{tpu_custom_call.1} parent=0
    #allocation2 [shape = 'u8[1024]{0}', space=vmem, size = 0x400, scoped, tag = 'output window, operand 0']
    #allocation3 [shape = 's32[2]{0}', space=sflag, size = 0x8, scoped, tag = 'scoped memory for tpu_custom_call.1']
    #allocation4 [shape = 'u8[1024]{0}', space=vmem, size = 0x400, scoped, tag = 'output window, operand 1']
    #allocation5 [shape = 's32[2]{0}', space=sflag, size = 0x8, scoped, tag = 'scoped memory for tpu_custom_call.1']
    %8 = vsyncpa [#allocation3], 0
    %s9 = scalar_lea.sflag [#allocation3], 1
    %10 = vsyncpa %s9, 0
    %11 = vsyncpa [#allocation5], 0
    %s12 = scalar_lea.sflag [#allocation5], 1
    %13 = vsyncpa %s12, 0
    loop: start=0, step=1, limit=4
    $region2: #{tpu_custom_call.1} parent=1 // loop_pre_header
      _
    $region3: #{tpu_custom_call.1} parent=1 // loop_header
      %s15 = sphi 0, %s19
      %p16 = scmp.ge.s32.totalorder %s15, 4
      %s22 = sphi 0, %s34
      %s23 = sphi 0, %s30
      %s24 = sphi 0, %s22
      %s25 = sphi 0, %s23
      %s26 = sphi 0, %s24
      %s27 = sphi 0, %s25
      %s39 = sphi 0, %s41
      %s42 = sphi 0, %s39
      %s43 = sphi 0, %s42
      %s59 = sphi 0, %s43
      %s67 = sphi 0, %s69
      %s70 = sphi 0, %s67
      %s71 = sphi 0, %s70
      %s87 = sphi 0, %s71
      %s95 = sphi 0, %s97
      %s98 = sphi 0, %s95
      %s99 = sphi 0, %s98
      %s115 = sphi 0, %s99
    $region4: #{tpu_custom_call.1} parent=1 // loop_header_branch
      %18 = sbr.rel (%p16) target = $region8
    $region5: #{tpu_custom_call.1} parent=1 // loop_body
      %s20 = ssub.s32 %s15, 1
      %s21 = ssub.s32 %s15, 2
      %s28 = sadd.s32 1, %s23
      %p29 = scmp.ge.s32.totalorder %s28, 1
      %s30 = scalar_select %p29, 0, %s28
      %s31 = sadd.s32 1, %s22
      %s32 = scalar_select %p29, %s31, %s22
      %p33 = scmp.ge.s32.totalorder %s32, 2
      %s34 = scalar_select %p33, 0, %s32
      %s35 = ssub.s32 %s22, %s34
      %s36 = ssub.s32 %s23, %s30
      %s37 = sor.u32 %s35, %s36
      %p38 = scmp.eq.s32.totalorder %s37, 0
      %s40 = sadd.s32 %s39, 1
      %s41 = scalar_select %p38, %s39, %s40
      %p44 = pneg %p38
      %p45 = scmp.eq.s32.totalorder %s15, 1
      %p46 = por %p44, %p45
      %p47 = scmp.ne.s32.totalorder %s39, %s42
      %p48 = scmp.eq.s32.totalorder %s15, 0
      %p49 = por %p47, %p48
      %p50 = scmp.ne.s32.totalorder %s39, %s42
      %p51 = scmp.eq.s32.totalorder %s20, 1
      %p52 = por %p50, %p51
      %p53 = scmp.ne.s32.totalorder %s42, %s43
      %p54 = scmp.eq.s32.totalorder %s20, 0
      %p55 = por %p53, %p54
      %p56 = scmp.ne.s32.totalorder %s42, %s43
      %p57 = scmp.eq.s32.totalorder %s21, 1
      %p58 = por %p56, %p57
      %p60 = scmp.ne.s32.totalorder %s43, %s59
      %p61 = scmp.eq.s32.totalorder %s21, 0
      %p62 = por %p60, %p61
      %s63 = ssub.s32 %s22, %s34
      %s64 = ssub.s32 %s23, %s30
      %s65 = sor.u32 %s63, %s64
      %p66 = scmp.eq.s32.totalorder %s65, 0
      %s68 = sadd.s32 %s67, 1
      %s69 = scalar_select %p66, %s67, %s68
      %p72 = pneg %p66
      %p73 = scmp.eq.s32.totalorder %s15, 1
      %p74 = por %p72, %p73
      %p75 = scmp.ne.s32.totalorder %s67, %s70
      %p76 = scmp.eq.s32.totalorder %s15, 0
      %p77 = por %p75, %p76
      %p78 = scmp.ne.s32.totalorder %s67, %s70
      %p79 = scmp.eq.s32.totalorder %s20, 1
      %p80 = por %p78, %p79
      %p81 = scmp.ne.s32.totalorder %s70, %s71
      %p82 = scmp.eq.s32.totalorder %s20, 0
      %p83 = por %p81, %p82
      %p84 = scmp.ne.s32.totalorder %s70, %s71
      %p85 = scmp.eq.s32.totalorder %s21, 1
      %p86 = por %p84, %p85
      %p88 = scmp.ne.s32.totalorder %s71, %s87
      %p89 = scmp.eq.s32.totalorder %s21, 0
      %p90 = por %p88, %p89
      %s91 = ssub.s32 %s22, %s34
      %s92 = ssub.s32 %s23, %s30
      %s93 = sor.u32 %s91, %s92
      %p94 = scmp.eq.s32.totalorder %s93, 0
      %s96 = sadd.s32 %s95, 1
      %s97 = scalar_select %p94, %s95, %s96
      %p100 = pneg %p94
      %p101 = scmp.eq.s32.totalorder %s15, 1
      %p102 = por %p100, %p101
      %p103 = scmp.ne.s32.totalorder %s95, %s98
      %p104 = scmp.eq.s32.totalorder %s15, 0
      %p105 = por %p103, %p104
      %p106 = scmp.ne.s32.totalorder %s95, %s98
      %p107 = scmp.eq.s32.totalorder %s20, 1
      %p108 = por %p106, %p107
      %p109 = scmp.ne.s32.totalorder %s98, %s99
      %p110 = scmp.eq.s32.totalorder %s20, 0
      %p111 = por %p109, %p110
      %p112 = scmp.ne.s32.totalorder %s98, %s99
      %p113 = scmp.eq.s32.totalorder %s21, 1
      %p114 = por %p112, %p113
      %p116 = scmp.ne.s32.totalorder %s99, %s115
      %p117 = scmp.eq.s32.totalorder %s21, 0
      %p118 = por %p116, %p117
      %p119 = scmp.le.s32.totalorder 1, %s15
      %p120 = scmp.lt.s32.totalorder %s15, 3
      %p121 = pnand %p119, %p120
      %p122 = pneg %p121
      // Predicated region
      $region9: #{tpu_custom_call.1} parent=5 // pred_check
        _
      $region10: #{tpu_custom_call.1} parent=5 // pred_check_branch
        %124 = sbr.rel (%p121) target = $region12
      $region11: #{tpu_custom_call.1} parent=5 // pred_region
        %s125 = ssub.s32 %s15, 1
      $region12: #{tpu_custom_call.1} parent=5 // pred_fallthru
        _
      %p126 = scmp.lt.s32.totalorder %s15, 2
      // Predicated region
      $region13: #{tpu_custom_call.1} parent=5 // pred_check
        %p127 = pneg %p126
      $region14: #{tpu_custom_call.1} parent=5 // pred_check_branch
        %129 = sbr.rel (%p127) target = $region16
      $region15: #{tpu_custom_call.1} parent=5 // pred_region
        // Predicated region
        $region17: #{tpu_custom_call.1} parent=15 // pred_check
          %p130 = pneg %p49
        $region18: #{tpu_custom_call.1} parent=15 // pred_check_branch
          %132 = sbr.rel (%p130) target = $region20
        $region19: #{tpu_custom_call.1} parent=15 // pred_region
          %s133 = smul.u32 8, %s23
          %p134 = scmp.lt.s32.totalorder %s22, 1
          %s135 = scalar_select %p134, %s22, 1
          %p136 = scmp.lt.s32.totalorder %s133, 7
          %s137 = scalar_select %p136, %s133, 7
          %s138 = smul.addr %s135, 32
          %s139 = sadd.s32 %s137, %s138
          %s140 = smul.addr %s139, 8
          %s141 = scalar_lea.vmem %s0, %s140
          %s142 = smul.u32 8, %s23
        $region20: #{tpu_custom_call.1} parent=15 // pred_fallthru
          _
      $region16: #{tpu_custom_call.1} parent=5 // pred_fallthru
        _
      %p143 = scmp.le.s32.totalorder 1, %s15
      %p144 = scmp.lt.s32.totalorder %s15, 3
      %p145 = pnand %p143, %p144
      %p146 = pneg %p145
      // Predicated region
      $region21: #{tpu_custom_call.1} parent=5 // pred_check
        _
      $region22: #{tpu_custom_call.1} parent=5 // pred_check_branch
        %148 = sbr.rel (%p145) target = $region24
      $region23: #{tpu_custom_call.1} parent=5 // pred_region
        %s149 = ssub.s32 %s15, 1
        %s150 = smul.u32 8, %s25
        %p151 = scmp.lt.s32.totalorder %s24, 1
        %s152 = scalar_select %p151, %s24, 1
        %p153 = scmp.lt.s32.totalorder %s150, 7
        %s154 = scalar_select %p153, %s150, 7
        %s155 = smul.addr %s152, 32
        %s156 = sadd.s32 %s154, %s155
        %s157 = smul.addr %s156, 8
        %s158 = scalar_lea.vmem %s0, %s157
        %p159 = pneg %p55
        %p160 = pneg %p52
        %p161 = pneg %p83
        %p162 = pneg %p80
        %s163 = sand.u32 %s70, 1
        %s164 = scalar_lea.sflag [#allocation3], %s163
        %s165 = sand.u32 %s70, 1
        %s166 = scalar_lea.vmem [#allocation2], %s165
        %p167 = pneg %p111
        %p168 = pneg %p108
        %s169 = sand.u32 %s98, 1
        %s170 = scalar_lea.sflag [#allocation5], %s169
        %s171 = sand.u32 %s98, 1
        %s172 = scalar_lea.vmem [#allocation4], %s171
        %s173 = smul.u32 8, %s25
        %p174 = scmp.lt.s32.totalorder %s24, 1
        %s175 = scalar_select %p174, %s24, 1
        %p176 = scmp.lt.s32.totalorder %s173, 7
        %s177 = scalar_select %p176, %s173, 7
        %s178 = smul.addr %s175, 32
        %s179 = sadd.s32 %s177, %s178
        %s180 = smul.addr %s179, 8
        %s181 = scalar_lea.vmem %s0, %s180
        %s182 = smul.u32 8, %s25
        %v183 = vld [vmem:[%s181] sm:$0xff]
        %v184 = vld [vmem:[%s181 + $0x8] sm:$0xff]
        %v185 = vld [vmem:[%s181 + $0x10] sm:$0xff]
        %v186 = vld [vmem:[%s181 + $0x18] sm:$0xff]
        %v187 = vld [vmem:[%s181 + $0x20] sm:$0xff]
        %v188 = vld [vmem:[%s181 + $0x28] sm:$0xff]
        %v189 = vld [vmem:[%s181 + $0x30] sm:$0xff]
        %v190 = vld [vmem:[%s181 + $0x38] sm:$0xff]
        %vm191 = vcmask 31744
        %v192 = vsel %vm191, %v183, 0.0
        %v193 = vsel %vm191, %v184, 0.0
        %v194 = vadd.f32 %v192, %v193
        %v195 = vsel %vm191, %v185, 0.0
        %v196 = vadd.f32 %v194, %v195
        %v197 = vsel %vm191, %v186, 0.0
        %v198 = vadd.f32 %v196, %v197
        %v199 = vsel %vm191, %v187, 0.0
        %v200 = vadd.f32 %v198, %v199
        %v201 = vsel %vm191, %v188, 0.0
        %v202 = vadd.f32 %v200, %v201
        %v203 = vsel %vm191, %v189, 0.0
        %v204 = vadd.f32 %v202, %v203
        %v205 = vsel %vm191, %v190, 0.0
        %v206 = vadd.f32 %v204, %v205
        %v207 = vrot.slane %v206, 4
        %v208 = vadd.f32 %v206, %v207
        %v209 = vrot.slane %v208, 2
        %v210 = vadd.f32 %v208, %v209
        %v211 = vrot.slane %v210, 1
        %v212 = vadd.f32 %v210, %v211
        %v213 = vadd.f32 %v212, 0.0
        %v214 = vmul.f32 %v183, %v183
        %v215 = vmul.f32 %v184, %v184
        %v216 = vmul.f32 %v185, %v185
        %v217 = vmul.f32 %v186, %v186
        %v218 = vmul.f32 %v187, %v187
        %v219 = vmul.f32 %v188, %v188
        %v220 = vmul.f32 %v189, %v189
        %v221 = vmul.f32 %v190, %v190
        %v222 = vsel %vm191, %v214, 0.0
        %v223 = vsel %vm191, %v215, 0.0
        %v224 = vadd.f32 %v222, %v223
        %v225 = vsel %vm191, %v216, 0.0
        %v226 = vadd.f32 %v224, %v225
        %v227 = vsel %vm191, %v217, 0.0
        %v228 = vadd.f32 %v226, %v227
        %v229 = vsel %vm191, %v218, 0.0
        %v230 = vadd.f32 %v228, %v229
        %v231 = vsel %vm191, %v219, 0.0
        %v232 = vadd.f32 %v230, %v231
        %v233 = vsel %vm191, %v220, 0.0
        %v234 = vadd.f32 %v232, %v233
        %v235 = vsel %vm191, %v221, 0.0
        %v236 = vadd.f32 %v234, %v235
        %v237 = vrot.slane %v236, 4
        %v238 = vadd.f32 %v236, %v237
        %v239 = vrot.slane %v238, 2
        %v240 = vadd.f32 %v238, %v239
        %v241 = vrot.slane %v240, 1
        %v242 = vadd.f32 %v240, %v241
        %v243 = vadd.f32 %v242, 0.0
        %s244 = scalar_lea.vmem %s181, 64
        %v245 = vld [vmem:[%s244] sm:$0xff]
        %v246 = vld [vmem:[%s244 + $0x8] sm:$0xff]
        %v247 = vld [vmem:[%s244 + $0x10] sm:$0xff]
        %v248 = vld [vmem:[%s244 + $0x18] sm:$0xff]
        %v249 = vld [vmem:[%s244 + $0x20] sm:$0xff]
        %v250 = vld [vmem:[%s244 + $0x28] sm:$0xff]
        %v251 = vld [vmem:[%s244 + $0x30] sm:$0xff]
        %v252 = vld [vmem:[%s244 + $0x38] sm:$0xff]
        %v253 = vsel %vm191, %v245, 0.0
        %v254 = vsel %vm191, %v246, 0.0
        %v255 = vadd.f32 %v253, %v254
        %v256 = vsel %vm191, %v247, 0.0
        %v257 = vadd.f32 %v255, %v256
        %v258 = vsel %vm191, %v248, 0.0
        %v259 = vadd.f32 %v257, %v258
        %v260 = vsel %vm191, %v249, 0.0
        %v261 = vadd.f32 %v259, %v260
        %v262 = vsel %vm191, %v250, 0.0
        %v263 = vadd.f32 %v261, %v262
        %v264 = vsel %vm191, %v251, 0.0
        %v265 = vadd.f32 %v263, %v264
        %v266 = vsel %vm191, %v252, 0.0
        %v267 = vadd.f32 %v265, %v266
        %v268 = vrot.slane %v267, 4
        %v269 = vadd.f32 %v267, %v268
        %v270 = vrot.slane %v269, 2
        %v271 = vadd.f32 %v269, %v270
        %v272 = vrot.slane %v271, 1
        %v273 = vadd.f32 %v271, %v272
        %v274 = vadd.f32 %v213, %v273
        %v275 = vmul.f32 %v245, %v245
        %v276 = vmul.f32 %v246, %v246
        %v277 = vmul.f32 %v247, %v247
        %v278 = vmul.f32 %v248, %v248
        %v279 = vmul.f32 %v249, %v249
        %v280 = vmul.f32 %v250, %v250
        %v281 = vmul.f32 %v251, %v251
        %v282 = vmul.f32 %v252, %v252
        %v283 = vsel %vm191, %v275, 0.0
        %v284 = vsel %vm191, %v276, 0.0
        %v285 = vadd.f32 %v283, %v284
        %v286 = vsel %vm191, %v277, 0.0
        %v287 = vadd.f32 %v285, %v286
        %v288 = vsel %vm191, %v278, 0.0
        %v289 = vadd.f32 %v287, %v288
        %v290 = vsel %vm191, %v279, 0.0
        %v291 = vadd.f32 %v289, %v290
        %v292 = vsel %vm191, %v280, 0.0
        %v293 = vadd.f32 %v291, %v292
        %v294 = vsel %vm191, %v281, 0.0
        %v295 = vadd.f32 %v293, %v294
        %v296 = vsel %vm191, %v282, 0.0
        %v297 = vadd.f32 %v295, %v296
        %v298 = vrot.slane %v297, 4
        %v299 = vadd.f32 %v297, %v298
        %v300 = vrot.slane %v299, 2
        %v301 = vadd.f32 %v299, %v300
        %v302 = vrot.slane %v301, 1
        %v303 = vadd.f32 %v301, %v302
        %v304 = vadd.f32 %v243, %v303
        %s305 = scalar_lea.vmem %s181, 128
        %v306 = vld [vmem:[%s305] sm:$0xff]
        %v307 = vld [vmem:[%s305 + $0x8] sm:$0xff]
        %v308 = vld [vmem:[%s305 + $0x10] sm:$0xff]
        %v309 = vld [vmem:[%s305 + $0x18] sm:$0xff]
        %v310 = vld [vmem:[%s305 + $0x20] sm:$0xff]
        %v311 = vld [vmem:[%s305 + $0x28] sm:$0xff]
        %v312 = vld [vmem:[%s305 + $0x30] sm:$0xff]
        %v313 = vld [vmem:[%s305 + $0x38] sm:$0xff]
        %v314 = vsel %vm191, %v306, 0.0
        %v315 = vsel %vm191, %v307, 0.0
        %v316 = vadd.f32 %v314, %v315
        %v317 = vsel %vm191, %v308, 0.0
        %v318 = vadd.f32 %v316, %v317
        %v319 = vsel %vm191, %v309, 0.0
        %v320 = vadd.f32 %v318, %v319
        %v321 = vsel %vm191, %v310, 0.0
        %v322 = vadd.f32 %v320, %v321
        %v323 = vsel %vm191, %v311, 0.0
        %v324 = vadd.f32 %v322, %v323
        %v325 = vsel %vm191, %v312, 0.0
        %v326 = vadd.f32 %v324, %v325
        %v327 = vsel %vm191, %v313, 0.0
        %v328 = vadd.f32 %v326, %v327
        %v329 = vrot.slane %v328, 4
        %v330 = vadd.f32 %v328, %v329
        %v331 = vrot.slane %v330, 2
        %v332 = vadd.f32 %v330, %v331
        %v333 = vrot.slane %v332, 1
        %v334 = vadd.f32 %v332, %v333
        %v335 = vadd.f32 %v274, %v334
        %v336 = vmul.f32 %v306, %v306
        %v337 = vmul.f32 %v307, %v307
        %v338 = vmul.f32 %v308, %v308
        %v339 = vmul.f32 %v309, %v309
        %v340 = vmul.f32 %v310, %v310
        %v341 = vmul.f32 %v311, %v311
        %v342 = vmul.f32 %v312, %v312
        %v343 = vmul.f32 %v313, %v313
        %v344 = vsel %vm191, %v336, 0.0
        %v345 = vsel %vm191, %v337, 0.0
        %v346 = vadd.f32 %v344, %v345
        %v347 = vsel %vm191, %v338, 0.0
        %v348 = vadd.f32 %v346, %v347
        %v349 = vsel %vm191, %v339, 0.0
        %v350 = vadd.f32 %v348, %v349
        %v351 = vsel %vm191, %v340, 0.0
        %v352 = vadd.f32 %v350, %v351
        %v353 = vsel %vm191, %v341, 0.0
        %v354 = vadd.f32 %v352, %v353
        %v355 = vsel %vm191, %v342, 0.0
        %v356 = vadd.f32 %v354, %v355
        %v357 = vsel %vm191, %v343, 0.0
        %v358 = vadd.f32 %v356, %v357
        %v359 = vrot.slane %v358, 4
        %v360 = vadd.f32 %v358, %v359
        %v361 = vrot.slane %v360, 2
        %v362 = vadd.f32 %v360, %v361
        %v363 = vrot.slane %v362, 1
        %v364 = vadd.f32 %v362, %v363
        %v365 = vadd.f32 %v304, %v364
        %s366 = scalar_lea.vmem %s181, 192
        %v367 = vld [vmem:[%s366] sm:$0xff]
        %v368 = vld [vmem:[%s366 + $0x8] sm:$0xff]
        %v369 = vld [vmem:[%s366 + $0x10] sm:$0xff]
        %v370 = vld [vmem:[%s366 + $0x18] sm:$0xff]
        %v371 = vld [vmem:[%s366 + $0x20] sm:$0xff]
        %v372 = vld [vmem:[%s366 + $0x28] sm:$0xff]
        %v373 = vld [vmem:[%s366 + $0x30] sm:$0xff]
        %v374 = vld [vmem:[%s366 + $0x38] sm:$0xff]
        %v375 = vsel %vm191, %v367, 0.0
        %v376 = vsel %vm191, %v368, 0.0
        %v377 = vadd.f32 %v375, %v376
        %v378 = vsel %vm191, %v369, 0.0
        %v379 = vadd.f32 %v377, %v378
        %v380 = vsel %vm191, %v370, 0.0
        %v381 = vadd.f32 %v379, %v380
        %v382 = vsel %vm191, %v371, 0.0
        %v383 = vadd.f32 %v381, %v382
        %v384 = vsel %vm191, %v372, 0.0
        %v385 = vadd.f32 %v383, %v384
        %v386 = vsel %vm191, %v373, 0.0
        %v387 = vadd.f32 %v385, %v386
        %v388 = vsel %vm191, %v374, 0.0
        %v389 = vadd.f32 %v387, %v388
        %v390 = vrot.slane %v389, 4
        %v391 = vadd.f32 %v389, %v390
        %v392 = vrot.slane %v391, 2
        %v393 = vadd.f32 %v391, %v392
        %v394 = vrot.slane %v393, 1
        %v395 = vadd.f32 %v393, %v394
        %v396 = vadd.f32 %v335, %v395
        %v397 = vmul.f32 %v367, %v367
        %v398 = vmul.f32 %v368, %v368
        %v399 = vmul.f32 %v369, %v369
        %v400 = vmul.f32 %v370, %v370
        %v401 = vmul.f32 %v371, %v371
        %v402 = vmul.f32 %v372, %v372
        %v403 = vmul.f32 %v373, %v373
        %v404 = vmul.f32 %v374, %v374
        %v405 = vsel %vm191, %v397, 0.0
        %v406 = vsel %vm191, %v398, 0.0
        %v407 = vadd.f32 %v405, %v406
        %v408 = vsel %vm191, %v399, 0.0
        %v409 = vadd.f32 %v407, %v408
        %v410 = vsel %vm191, %v400, 0.0
        %v411 = vadd.f32 %v409, %v410
        %v412 = vsel %vm191, %v401, 0.0
        %v413 = vadd.f32 %v411, %v412
        %v414 = vsel %vm191, %v402, 0.0
        %v415 = vadd.f32 %v413, %v414
        %v416 = vsel %vm191, %v403, 0.0
        %v417 = vadd.f32 %v415, %v416
        %v418 = vsel %vm191, %v404, 0.0
        %v419 = vadd.f32 %v417, %v418
        %v420 = vrot.slane %v419, 4
        %v421 = vadd.f32 %v419, %v420
        %v422 = vrot.slane %v421, 2
        %v423 = vadd.f32 %v421, %v422
        %v424 = vrot.slane %v423, 1
        %v425 = vadd.f32 %v423, %v424
        %v426 = vadd.f32 %v365, %v425
        %vm427 = vcmask 24576
        %428 = vst.msk [vmem:[%s166] sm:$0x1] %vm427, %v396
        %429 = vst.msk [vmem:[%s172] sm:$0x1] %vm427, %v426
        %s430 = sand.u32 %s70, 1
        %s431 = scalar_lea.sflag [#allocation3], %s430
        %s432 = sand.u32 %s70, 1
        %s433 = scalar_lea.vmem [#allocation2], %s432
        %s434 = sand.u32 %s98, 1
        %s435 = scalar_lea.sflag [#allocation5], %s434
        %s436 = sand.u32 %s98, 1
        %s437 = scalar_lea.vmem [#allocation4], %s436
        // Predicated region
        $region25: #{tpu_custom_call.1} parent=23 // pred_check
          %p438 = pneg %p80
        $region26: #{tpu_custom_call.1} parent=23 // pred_check_branch
          %440 = sbr.rel (%p438) target = $region28
        $region27: #{tpu_custom_call.1} parent=23 // pred_region
          %s442 = ssub.s32 16, 16
          %443 = vsyncadd %s431, %s442
          %s444 = sadd.s32 %s25, %s24
          %s445 = smul.addr %s444, 16
          %s446 = scalar_lea.hbm %s1, %s445
          %s448 = sshll.u32 %s433, 4
          %s449 = int_to_ptr.vmem [resolvable:$true] %s448
          %451 = dma.vmem_to_hbm [thread:$0]  %s449, 16, %s446, %s431
        $region28: #{tpu_custom_call.1} parent=23 // pred_fallthru
          _
        // Predicated region
        $region29: #{tpu_custom_call.1} parent=23 // pred_check
          %p452 = pneg %p108
        $region30: #{tpu_custom_call.1} parent=23 // pred_check_branch
          %454 = sbr.rel (%p452) target = $region32
        $region31: #{tpu_custom_call.1} parent=23 // pred_region
          %s456 = ssub.s32 16, 16
          %457 = vsyncadd %s435, %s456
          %s458 = sadd.s32 %s25, %s24
          %s459 = smul.addr %s458, 16
          %s460 = scalar_lea.hbm %s2, %s459
          %s462 = sshll.u32 %s437, 4
          %s463 = int_to_ptr.vmem [resolvable:$true] %s462
          %465 = dma.vmem_to_hbm [thread:$0]  %s463, 16, %s460, %s435
        $region32: #{tpu_custom_call.1} parent=23 // pred_fallthru
          _
      $region24: #{tpu_custom_call.1} parent=5 // pred_fallthru
        _
      %p466 = scmp.le.s32.totalorder 2, %s15
      // Predicated region
      $region33: #{tpu_custom_call.1} parent=5 // pred_check
        %p467 = pneg %p466
      $region34: #{tpu_custom_call.1} parent=5 // pred_check_branch
        %469 = sbr.rel (%p467) target = $region36
      $region35: #{tpu_custom_call.1} parent=5 // pred_region
        %s470 = ssub.s32 %s15, 2
        // Predicated region
        $region37: #{tpu_custom_call.1} parent=35 // pred_check
          %p471 = pneg %p86
        $region38: #{tpu_custom_call.1} parent=35 // pred_check_branch
          %473 = sbr.rel (%p471) target = $region40
        $region39: #{tpu_custom_call.1} parent=35 // pred_region
          %s474 = sand.u32 %s71, 1
          %s475 = scalar_lea.sflag [#allocation3], %s474
          %s476 = sand.u32 %s71, 1
          %s477 = scalar_lea.vmem [#allocation2], %s476
          %478 = dma.done %s475, 16
        $region40: #{tpu_custom_call.1} parent=35 // pred_fallthru
          _
        // Predicated region
        $region41: #{tpu_custom_call.1} parent=35 // pred_check
          %p479 = pneg %p114
        $region42: #{tpu_custom_call.1} parent=35 // pred_check_branch
          %481 = sbr.rel (%p479) target = $region44
        $region43: #{tpu_custom_call.1} parent=35 // pred_region
          %s482 = sand.u32 %s99, 1
          %s483 = scalar_lea.sflag [#allocation5], %s482
          %s484 = sand.u32 %s99, 1
          %s485 = scalar_lea.vmem [#allocation4], %s484
          %486 = dma.done %s483, 16
        $region44: #{tpu_custom_call.1} parent=35 // pred_fallthru
          _
      $region36: #{tpu_custom_call.1} parent=5 // pred_fallthru
        _
    $region6: #{tpu_custom_call.1} parent=1 // loop_footer
      %s19 = sadd.s32 1, %s15
    $region7: #{tpu_custom_call.1} parent=1 // loop_footer_branch
      %14 = sbr.rel target = $region3
    $region8: #{tpu_custom_call.1} parent=1 // loop_exit
      _
    %487 = vsyncpa [#allocation3], 1
    %s488 = scalar_lea.sflag [#allocation3], 1
    %489 = vsyncpa %s488, 1
    %490 = vsyncpa [#allocation5], 1
    %s491 = scalar_lea.sflag [#allocation5], 1
    %492 = vsyncpa %s491, 1

</llo_original>
